<compile_context>
chip_gen: v7x
topology: tpu7x:2x2x1
jax: 0.10.0
libtpu: 0.0.40
codegen_flags: <defaults>
</compile_context>

<pallas_src>
import jax
import jax.numpy as jnp
from jax.experimental import pallas as pl
from jax.experimental.pallas import tpu as pltpu

DROPOUT_P = 0.1
# nn.Dropout drops with probability p; keep if hash >= p * 2^32.
_DROP_THRESHOLD = int(DROPOUT_P * (2.0 ** 32))
_KEEP_SCALE = 1.0 / (1.0 - DROPOUT_P)


def _keep_mask(idx_u32, seed_u32):
    """Cheapened stateless dropout hash shared by kernel and reference.

    2-round mix; the seed * golden-ratio multiply is a scalar (hoisted off the
    vector path inside the kernel).
    """
    h = idx_u32 ^ (seed_u32 * jnp.uint32(0x9E3779B9))
    h = (h ^ (h >> 16)) * jnp.uint32(0x7FEB352D)
    h = h ^ (h >> 15)
    return h >= jnp.uint32(_DROP_THRESHOLD)


def _residual_dropout_kernel(seed_ref, x_ref, w_ref, b_ref, o_ref):
    tm, hidden = x_ref.shape
    tn = o_ref.shape[1]

    row0 = pl.program_id(0) * tm
    col0 = pl.multiple_of(pl.program_id(1) * tn, 128)

    x = x_ref[...]

    # sublayer(x): Linear on the MXU; bf16 (or native) operands, f32 accum.
    y = jnp.dot(x.astype(w_ref.dtype), w_ref[...],
                preferred_element_type=jnp.float32)
    y = y + b_ref[...].astype(jnp.float32)

    # Stateless dropout mask from the GLOBAL element index (grid-invariant).
    base = (row0 * hidden + col0).astype(jnp.uint32)          # scalar unit
    r = jax.lax.broadcasted_iota(jnp.int32, (tm, tn), 0).astype(jnp.uint32)
    c = jax.lax.broadcasted_iota(jnp.int32, (tm, tn), 1).astype(jnp.uint32)
    if hidden & (hidden - 1) == 0:                            # power of two
        row_term = r << (hidden.bit_length() - 1)             # shift, not mul
    else:
        row_term = r * jnp.uint32(hidden)
    idx = base + row_term + c
    keep = _keep_mask(idx, seed_ref[0].astype(jnp.uint32))

    # Fused dropout select: one scale array, one multiply.
    y = y * (keep.astype(jnp.float32) * jnp.float32(_KEEP_SCALE))

    # Residual connection on the original-precision activations.
    if tn == hidden:
        x_res = x
    else:
        x_res = x_ref[:, pl.ds(col0, tn)]
    o_ref[...] = (x_res.astype(jnp.float32) + y).astype(o_ref.dtype)


def _vmem_capacity_bytes():
    try:
        return int(pltpu.get_tpu_info().vmem_capacity_bytes)
    except Exception:
        return 64 << 20  # conservative: v7x per-TensorCore capacity


def _pick_row_tile(rows):
    """Largest row tile that divides rows, is a multiple of 8, and leaves at
    least 2 grid steps (pipeline overlap / v7x megacore)."""
    if rows < 16:
        return rows
    cap = min(1024, rows // 2)
    for cand in (1024, 768, 512, 384, 256, 128, 64, 32, 16, 8):
        if cand <= cap and rows % cand == 0:
            return cand
    return rows  # no aligned divisor: single full tile


def _pick_col_tile(hidden, w_itemsize):
    """Keep W fully resident when it fits comfortably (~20 MiB); otherwise
    column-tile so v7x's 64 MiB VMEM still holds W + x/out double-buffers."""
    if hidden * hidden * w_itemsize <= (20 << 20) or hidden % 128 != 0:
        return hidden
    for cand in (512, 256, 128):
        if hidden % cand == 0:
            return cand
    return hidden


def residual_connection_layer(x, w, b, seed=0, use_bf16_matmul=True):
    """x: [batch, seq, hidden]; w: [hidden, hidden]; b: [hidden]."""
    batch, seq, hidden = x.shape
    assert w.shape == (hidden, hidden) and b.shape == (hidden,)
    rows = batch * seq

    x2d = x.reshape(rows, hidden)
    mxu_dtype = jnp.bfloat16 if use_bf16_matmul else x.dtype
    w_mxu = w.astype(mxu_dtype)
    b2d = b.reshape(1, hidden)
    seed_arr = jnp.array([seed], dtype=jnp.int32)

    tm = _pick_row_tile(rows)
    tn = _pick_col_tile(hidden, w_mxu.dtype.itemsize)
    resident_w = (tn == hidden)
    w_bufs = 1 if resident_w else 2

    # --- VMEM budget: what the BlockSpecs will actually allocate -----------
    x_it = x2d.dtype.itemsize
    w_it = w_mxu.dtype.itemsize
    o_it = x.dtype.itemsize

    def _vmem_needed(tm_):
        return (2 * tm_ * hidden * x_it            # double-buffered x tile
                + 2 * tm_ * tn * o_it              # double-buffered out tile
                + w_bufs * hidden * tn * w_it      # weight buffer(s)
                + w_bufs * 8 * tn * b2d.dtype.itemsize  # bias (sublane-padded)
                + 2 * tm_ * tn * 4                 # f32 intermediates headroom
                + (2 << 20))                       # compiler scratch headroom

    cap = int(0.88 * _vmem_capacity_bytes())
    while _vmem_needed(tm) > cap and tm >= 16 and rows % (tm // 2) == 0:
        tm //= 2
    vmem_limit = int(min(max(_vmem_needed(tm), 16 << 20), cap))

    grid = (rows // tm, hidden // tn)

    # W / b: constant-per-row index maps; single-buffer them when resident.
    w_mode = pl.Buffered(1) if resident_w else pl.Buffered(2)
    b_mode = pl.Buffered(1) if resident_w else pl.Buffered(2)

    out2d = pl.pallas_call(
        _residual_dropout_kernel,
        out_shape=jax.ShapeDtypeStruct((rows, hidden), x.dtype),
        grid_spec=pltpu.PrefetchScalarGridSpec(
            num_scalar_prefetch=1,
            grid=grid,
            in_specs=[
                pl.BlockSpec((tm, hidden), lambda i, j, s: (i, 0)),
                pl.BlockSpec((hidden, tn), lambda i, j, s: (0, j),
                             pipeline_mode=w_mode),
                pl.BlockSpec((1, tn), lambda i, j, s: (0, j),
                             pipeline_mode=b_mode),
            ],
            out_specs=pl.BlockSpec((tm, tn), lambda i, j, s: (i, j)),
        ),
        compiler_params=pltpu.CompilerParams(
            dimension_semantics=("parallel", "arbitrary"),
            vmem_limit_bytes=vmem_limit,
        ),
    )(seed_arr, x2d, w_mxu, b2d)

    return out2d.reshape(batch, seq, hidden)


def _reference(x, w, b, seed, use_bf16_matmul=True):
    """Pure-JAX reference with the same dropout hash and MXU dtype."""
    batch, seq, hidden = x.shape
    rows = batch * seq
    x2 = x.reshape(rows, hidden)
    mxu_dtype = jnp.bfloat16 if use_bf16_matmul else x.dtype
    y = jnp.dot(x2.astype(mxu_dtype), w.astype(mxu_dtype),
                preferred_element_type=jnp.float32)
    y = y + b.astype(jnp.float32)[None, :]
    rid = jnp.arange(rows, dtype=jnp.uint32)[:, None]
    cid = jnp.arange(hidden, dtype=jnp.uint32)[None, :]
    idx = rid * jnp.uint32(hidden) + cid
    keep = _keep_mask(idx, jnp.uint32(seed))
    y = y * (keep.astype(jnp.float32) * jnp.float32(_KEEP_SCALE))
    out = x2.astype(jnp.float32) + y
    return out.reshape(batch, seq, hidden).astype(x.dtype)


if __name__ == "__main__":
    key = jax.random.PRNGKey(0)
    kx, kw, kb = jax.random.split(key, 3)

    # hidden kept a multiple of 128 so stores are lane-dense.
    batch, seq, hidden = 2, 8, 128
    x = jax.random.normal(kx, (batch, seq, hidden), dtype=jnp.float32)

    # Deterministic "sublayer" params (Linear hidden -> hidden).
    w = jax.random.normal(kw, (hidden, hidden), dtype=jnp.float32) * (hidden ** -0.5)
    b = jax.random.normal(kb, (hidden,), dtype=jnp.float32) * 0.01

    out = residual_connection_layer(x, w, b, seed=0)
    jax.block_until_ready(out)

    assert out.shape == x.shape and out.dtype == x.dtype
    ref = _reference(x, w, b, seed=0)
    max_err = float(jnp.max(jnp.abs(out.astype(jnp.float32) - ref.astype(jnp.float32))))
    assert max_err < 5e-2, f"mismatch vs reference: {max_err}"
    print("KERNEL_OK")
</pallas_src>

<mosaic_0001>
module attributes {stable_mosaic.version = 11 : i64} {
  func.func @_residual_dropout_kernel(%arg0: i32, %arg1: i32, %arg2: memref<1xi32, #tpu.memory_space<smem>>, %arg3: memref<8x128xf32, #tpu.memory_space<vmem>>, %arg4: memref<128x128xbf16, #tpu.memory_space<vmem>>, %arg5: memref<1x128xf32, #tpu.memory_space<vmem>>, %arg6: memref<8x128xf32, #tpu.memory_space<vmem>>) attributes {dimension_semantics = [#tpu.dimension_semantics<parallel>, #tpu.dimension_semantics<arbitrary>], iteration_bounds = array<i64: 2, 1>, scalar_prefetch = 1 : i64, scratch_operands = 0 : i64, tpu.core_type = #tpu.core_type<tc>, window_params = [{transform_indices = @transform_0, window_bounds = array<i64: 8, 128>}, {pipeline_mode = #tpu.pipeline_mode<synchronous>, transform_indices = @transform_1, window_bounds = array<i64: 128, 128>}, {pipeline_mode = #tpu.pipeline_mode<synchronous>, transform_indices = @transform_2, window_bounds = array<i64: 1, 128>}, {transform_indices = @transform_3, window_bounds = array<i64: 8, 128>}]} {
    %c8_i32 = arith.constant 8 : i32
    %0 = arith.muli %arg0, %c8_i32 : i32
    %c128_i32 = arith.constant 128 : i32
    %1 = arith.muli %arg1, %c128_i32 : i32
    %2 = tpu.assume_multiple %1, 128 : i32
    %c0 = arith.constant 0 : index
    %c0_0 = arith.constant 0 : index
    %3 = vector.load %arg3[%c0, %c0_0] : memref<8x128xf32, #tpu.memory_space<vmem>>, vector<8x128xf32>
    %4 = arith.truncf %3 : vector<8x128xf32> to vector<8x128xbf16>
    %c0_1 = arith.constant 0 : index
    %c0_2 = arith.constant 0 : index
    %5 = vector.load %arg4[%c0_1, %c0_2] : memref<128x128xbf16, #tpu.memory_space<vmem>>, vector<128x128xbf16>
    %cst = arith.constant dense<0.000000e+00> : vector<8x128xf32>
    %6 = tpu.matmul %4, %5, %cst {dimension_numbers = #tpu.dot_dimension_numbers<[1], [0], [0], [1], [0, 0, 1, 1], [], []>} : vector<8x128xbf16>, vector<128x128xbf16>, vector<8x128xf32> -> vector<8x128xf32>
    %c0_3 = arith.constant 0 : index
    %c0_4 = arith.constant 0 : index
    %7 = vector.load %arg5[%c0_3, %c0_4] : memref<1x128xf32, #tpu.memory_space<vmem>>, vector<1x128xf32>
    %8 = vector.broadcast %7 : vector<1x128xf32> to vector<8x128xf32>
    %9 = arith.addf %6, %8 : vector<8x128xf32>
    %c128_i32_5 = arith.constant 128 : i32
    %10 = arith.muli %0, %c128_i32_5 : i32
    %11 = arith.addi %10, %2 : i32
    %12 = tpu.iota {dimensions = array<i32: 0>} : vector<8x128xi32>
    %13 = tpu.iota {dimensions = array<i32: 1>} : vector<8x128xi32>
    %c7_i32 = arith.constant 7 : i32
    %14 = vector.broadcast %c7_i32 : i32 to vector<8x128xi32>
    %15 = arith.shli %12, %14 : vector<8x128xi32>
    %16 = vector.broadcast %11 : i32 to vector<8x128xi32>
    %17 = arith.addi %16, %15 : vector<8x128xi32>
    %18 = arith.addi %17, %13 : vector<8x128xi32>
    %c0_6 = arith.constant 0 : index
    %19 = memref.load %arg2[%c0_6] : memref<1xi32, #tpu.memory_space<smem>>
    %c-1640531527_i32 = arith.constant -1640531527 : i32
    %20 = arith.muli %19, %c-1640531527_i32 : i32
    %21 = vector.broadcast %20 : i32 to vector<8x128xi32>
    %22 = arith.xori %18, %21 : vector<8x128xi32>
    %c16_i32 = arith.constant 16 : i32
    %23 = vector.broadcast %c16_i32 : i32 to vector<8x128xi32>
    %24 = arith.shrui %22, %23 : vector<8x128xi32>
    %25 = arith.xori %22, %24 : vector<8x128xi32>
    %c2146121005_i32 = arith.constant 2146121005 : i32
    %26 = vector.broadcast %c2146121005_i32 : i32 to vector<8x128xi32>
    %27 = arith.muli %25, %26 : vector<8x128xi32>
    %c15_i32 = arith.constant 15 : i32
    %28 = vector.broadcast %c15_i32 : i32 to vector<8x128xi32>
    %29 = arith.shrui %27, %28 : vector<8x128xi32>
    %30 = arith.xori %27, %29 : vector<8x128xi32>
    %c429496729_i32 = arith.constant 429496729 : i32
    %31 = vector.broadcast %c429496729_i32 : i32 to vector<8x128xi32>
    %32 = arith.cmpi uge, %30, %31 : vector<8x128xi32>
    %33 = arith.extui %32 : vector<8x128xi1> to vector<8x128xi32>
    %34 = arith.sitofp %33 : vector<8x128xi32> to vector<8x128xf32>
    %cst_7 = arith.constant 1.11111116 : f32
    %35 = vector.broadcast %cst_7 : f32 to vector<8x128xf32>
    %36 = arith.mulf %34, %35 : vector<8x128xf32>
    %37 = arith.mulf %9, %36 : vector<8x128xf32>
    %38 = arith.addf %3, %37 : vector<8x128xf32>
    %c0_8 = arith.constant 0 : index
    %c0_9 = arith.constant 0 : index
    %39 = vector.load %arg6[%c0_8, %c0_9] : memref<8x128xf32, #tpu.memory_space<vmem>>, vector<8x128xf32>
    tpu.vector_store %arg6[%c0_8, %c0_9], %38 {strides = array<i32>} : memref<8x128xf32, #tpu.memory_space<vmem>>, vector<8x128xf32>,
    return
  }
  func.func @transform_0(%arg0: i32, %arg1: i32, %arg2: memref<1xi32, #tpu.memory_space<smem>>) -> (i32, i32) {
    %c0_i32 = arith.constant 0 : i32
    %c0_i32_0 = arith.constant 0 : i32
    return %arg0, %c0_i32 : i32, i32
  }
  func.func @transform_1(%arg0: i32, %arg1: i32, %arg2: memref<1xi32, #tpu.memory_space<smem>>) -> (i32, i32) {
    %c0_i32 = arith.constant 0 : i32
    %c0_i32_0 = arith.constant 0 : i32
    return %c0_i32, %arg1 : i32, i32
  }
  func.func @transform_2(%arg0: i32, %arg1: i32, %arg2: memref<1xi32, #tpu.memory_space<smem>>) -> (i32, i32) {
    %c0_i32 = arith.constant 0 : i32
    %c0_i32_0 = arith.constant 0 : i32
    return %c0_i32, %arg1 : i32, i32
  }
  func.func @transform_3(%arg0: i32, %arg1: i32, %arg2: memref<1xi32, #tpu.memory_space<smem>>) -> (i32, i32) {
    %c0_i32 = arith.constant 0 : i32
    return %arg0, %arg1 : i32, i32
  }
}

</mosaic_0001>

<llo_original>
// kernel: tpu_custom_call.1
$region0: #{tpu_custom_call.1}
  #allocation0 [shape = 'u32[]', space=smem, size = 0x4, offset = 0x4, fixed_abs, tag = 'smem constant byte address 0x4 - core index']
  #allocation1 [shape = 'u32[144,128]{1,0:T(1,128)}', space=vmem, size = 0x12000, scoped, tag = 'internal scratch']
  #allocation2 [shape = 's32[1]{0}', space=sflag, size = 0x4, scoped, tag = 'scoped memory for tpu_custom_call.1']
  #allocation3 [shape = 's32[1]{0:T(128)S(6)}', space=smem, size = 0x200, scoped, tag = 'prefetched SMEM operand 0']
  %s0 = inlined_call_operand.<no memory space> [shape: s32[1], index: 0, kind: input, shape index: {}]
  %s1 = inlined_call_operand.hbm [shape: f32[16,128], index: 1, kind: input, shape index: {}]
  %s2 = inlined_call_operand.hbm [shape: bf16[128,128], index: 2, kind: input, shape index: {}]
  %s3 = inlined_call_operand.vmem [shape: f32[1,128], index: 3, kind: input, shape index: {}]
  %s4 = inlined_call_operand.hbm [shape: f32[16,128], index: 4, kind: output, shape index: {}]
  %s5 = sld [smem:[#allocation0]]
  $region53: #{tpu_custom_call.1} parent=0
    _
  %s7 = ssub.s32 1, %s5
  %s8 = scalar_select 0, %s7, %s5
  %9 = sst [smem:[#allocation3]] %s0
  $region1: #{tpu_custom_call.1} parent=0
    #allocation4 [shape = 'u8[8192]{0}', space=vmem, size = 0x2000, scoped, tag = 'input window, operand 1']
    #allocation5 [shape = 's32[2]{0}', space=sflag, size = 0x8, scoped, tag = 'scoped memory for tpu_custom_call.1']
    #allocation6 [shape = 's32[2]{0}', space=sflag, size = 0x8, scoped, tag = 'scoped memory for tpu_custom_call.1']
    #allocation7 [shape = 'u8[32768]{0}', space=vmem, size = 0x8000, scoped, tag = 'input window, operand 2, single buffered']
    #allocation8 [shape = 's32[1]{0}', space=sflag, size = 0x4, scoped, tag = 'scoped memory for tpu_custom_call.1']
    #allocation9 [shape = 'u8[8192]{0}', space=vmem, size = 0x2000, scoped, tag = 'output window, operand 0']
    %10 = vsyncpa [#allocation5], 0
    %s11 = scalar_lea.sflag [#allocation5], 1
    %12 = vsyncpa %s11, 0
    %13 = vsyncpa [#allocation8], 0
    %14 = vsyncpa [#allocation6], 0
    %s15 = scalar_lea.sflag [#allocation6], 1
    %16 = vsyncpa %s15, 0
    loop: start=0, step=1, limit=4
    $region2: #{tpu_custom_call.1} parent=1 // loop_pre_header
      _
    $region3: #{tpu_custom_call.1} parent=1 // loop_header
      %s18 = sphi 0, %s22
      %p19 = scmp.ge.s32.totalorder %s18, 4
      %s25 = sphi 0, %s37
      %s26 = sphi 0, %s33
      %s27 = sphi 0, %s25
      %s28 = sphi 0, %s26
      %s29 = sphi 0, %s27
      %s30 = sphi 0, %s28
      %s40 = sphi 0, %s42
      %s43 = sphi 0, %s40
      %s44 = sphi 0, %s43
      %s60 = sphi 0, %s44
      %s66 = sphi 0, %s68
      %s69 = sphi 0, %s66
      %s70 = sphi 0, %s69
      %s86 = sphi 0, %s70
      %s92 = sphi 0, %s94
      %s95 = sphi 0, %s92
      %s96 = sphi 0, %s95
      %s112 = sphi 0, %s96
      %s120 = sphi 0, %s122
      %s123 = sphi 0, %s120
      %s124 = sphi 0, %s123
      %s140 = sphi 0, %s124
    $region4: #{tpu_custom_call.1} parent=1 // loop_header_branch
      %21 = sbr.rel (%p19) target = $region8
    $region5: #{tpu_custom_call.1} parent=1 // loop_body
      %s23 = ssub.s32 %s18, 1
      %s24 = ssub.s32 %s18, 2
      %s31 = sadd.s32 1, %s26
      %p32 = scmp.ge.s32.totalorder %s31, 1
      %s33 = scalar_select %p32, 0, %s31
      %s34 = sadd.s32 1, %s25
      %s35 = scalar_select %p32, %s34, %s25
      %p36 = scmp.ge.s32.totalorder %s35, 2
      %s37 = scalar_select %p36, 0, %s35
      %s38 = ssub.s32 %s25, %s37
      %p39 = scmp.eq.s32.totalorder %s38, 0
      %s41 = sadd.s32 %s40, 1
      %s42 = scalar_select %p39, %s40, %s41
      %p45 = pneg %p39
      %p46 = scmp.eq.s32.totalorder %s18, 1
      %p47 = por %p45, %p46
      %p48 = scmp.ne.s32.totalorder %s40, %s43
      %p49 = scmp.eq.s32.totalorder %s18, 0
      %p50 = por %p48, %p49
      %p51 = scmp.ne.s32.totalorder %s40, %s43
      %p52 = scmp.eq.s32.totalorder %s23, 1
      %p53 = por %p51, %p52
      %p54 = scmp.ne.s32.totalorder %s43, %s44
      %p55 = scmp.eq.s32.totalorder %s23, 0
      %p56 = por %p54, %p55
      %p57 = scmp.ne.s32.totalorder %s43, %s44
      %p58 = scmp.eq.s32.totalorder %s24, 1
      %p59 = por %p57, %p58
      %p61 = scmp.ne.s32.totalorder %s44, %s60
      %p62 = scmp.eq.s32.totalorder %s24, 0
      %p63 = por %p61, %p62
      %s64 = ssub.s32 %s26, %s33
      %p65 = scmp.eq.s32.totalorder %s64, 0
      %s67 = sadd.s32 %s66, 1
      %s68 = scalar_select %p65, %s66, %s67
      %p71 = pneg %p65
      %p72 = scmp.eq.s32.totalorder %s18, 1
      %p73 = por %p71, %p72
      %p74 = scmp.ne.s32.totalorder %s66, %s69
      %p75 = scmp.eq.s32.totalorder %s18, 0
      %p76 = por %p74, %p75
      %p77 = scmp.ne.s32.totalorder %s66, %s69
      %p78 = scmp.eq.s32.totalorder %s23, 1
      %p79 = por %p77, %p78
      %p80 = scmp.ne.s32.totalorder %s69, %s70
      %p81 = scmp.eq.s32.totalorder %s23, 0
      %p82 = por %p80, %p81
      %p83 = scmp.ne.s32.totalorder %s69, %s70
      %p84 = scmp.eq.s32.totalorder %s24, 1
      %p85 = por %p83, %p84
      %p87 = scmp.ne.s32.totalorder %s70, %s86
      %p88 = scmp.eq.s32.totalorder %s24, 0
      %p89 = por %p87, %p88
      %s90 = ssub.s32 %s26, %s33
      %p91 = scmp.eq.s32.totalorder %s90, 0
      %s93 = sadd.s32 %s92, 1
      %s94 = scalar_select %p91, %s92, %s93
      %p97 = pneg %p91
      %p98 = scmp.eq.s32.totalorder %s18, 1
      %p99 = por %p97, %p98
      %p100 = scmp.ne.s32.totalorder %s92, %s95
      %p101 = scmp.eq.s32.totalorder %s18, 0
      %p102 = por %p100, %p101
      %p103 = scmp.ne.s32.totalorder %s92, %s95
      %p104 = scmp.eq.s32.totalorder %s23, 1
      %p105 = por %p103, %p104
      %p106 = scmp.ne.s32.totalorder %s95, %s96
      %p107 = scmp.eq.s32.totalorder %s23, 0
      %p108 = por %p106, %p107
      %p109 = scmp.ne.s32.totalorder %s95, %s96
      %p110 = scmp.eq.s32.totalorder %s24, 1
      %p111 = por %p109, %p110
      %p113 = scmp.ne.s32.totalorder %s96, %s112
      %p114 = scmp.eq.s32.totalorder %s24, 0
      %p115 = por %p113, %p114
      %s116 = ssub.s32 %s25, %s37
      %s117 = ssub.s32 %s26, %s33
      %s118 = sor.u32 %s116, %s117
      %p119 = scmp.eq.s32.totalorder %s118, 0
      %s121 = sadd.s32 %s120, 1
      %s122 = scalar_select %p119, %s120, %s121
      %p125 = pneg %p119
      %p126 = scmp.eq.s32.totalorder %s18, 1
      %p127 = por %p125, %p126
      %p128 = scmp.ne.s32.totalorder %s120, %s123
      %p129 = scmp.eq.s32.totalorder %s18, 0
      %p130 = por %p128, %p129
      %p131 = scmp.ne.s32.totalorder %s120, %s123
      %p132 = scmp.eq.s32.totalorder %s23, 1
      %p133 = por %p131, %p132
      %p134 = scmp.ne.s32.totalorder %s123, %s124
      %p135 = scmp.eq.s32.totalorder %s23, 0
      %p136 = por %p134, %p135
      %p137 = scmp.ne.s32.totalorder %s123, %s124
      %p138 = scmp.eq.s32.totalorder %s24, 1
      %p139 = por %p137, %p138
      %p141 = scmp.ne.s32.totalorder %s124, %s140
      %p142 = scmp.eq.s32.totalorder %s24, 0
      %p143 = por %p141, %p142
      %p144 = scmp.le.s32.totalorder 1, %s18
      %p145 = scmp.lt.s32.totalorder %s18, 3
      %p146 = pnand %p144, %p145
      %p147 = pneg %p146
      // Predicated region
      $region9: #{tpu_custom_call.1} parent=5 // pred_check
        _
      $region10: #{tpu_custom_call.1} parent=5 // pred_check_branch
        %149 = sbr.rel (%p146) target = $region12
      $region11: #{tpu_custom_call.1} parent=5 // pred_region
        %s150 = ssub.s32 %s18, 1
        // Predicated region
        $region13: #{tpu_custom_call.1} parent=11 // pred_check
          %p151 = pneg %p82
        $region14: #{tpu_custom_call.1} parent=11 // pred_check_branch
          %153 = sbr.rel (%p151) target = $region16
        $region15: #{tpu_custom_call.1} parent=11 // pred_region
          %s155 = ssub.s32 1024, 1024
          %156 = vsyncadd [#allocation8], %s155
          %s157 = smul.addr %s28, 64
          %s158 = scalar_lea.hbm %s2, %s157
          %s159 = sshll.u32 [#allocation7], 4
          %s160 = int_to_ptr.vmem [resolvable:$true] %s159
          %165 = dma.hbm_to_vmem [thread:$0]  %s158, 1024, %s160, [#allocation8], 64, 64, 4
        $region16: #{tpu_custom_call.1} parent=11 // pred_fallthru
          _
        // Predicated region
        $region17: #{tpu_custom_call.1} parent=11 // pred_check
          %p166 = pneg %p108
        $region18: #{tpu_custom_call.1} parent=11 // pred_check_branch
          %168 = sbr.rel (%p166) target = $region20
        $region19: #{tpu_custom_call.1} parent=11 // pred_region
          %p169 = scmp.lt.s32.totalorder %s28, 0
          %s170 = scalar_select %p169, %s28, 0
          %s171 = scalar_lea.vmem %s3, %s170
        $region20: #{tpu_custom_call.1} parent=11 // pred_fallthru
          _
      $region12: #{tpu_custom_call.1} parent=5 // pred_fallthru
        _
      %p172 = scmp.lt.s32.totalorder %s18, 2
      // Predicated region
      $region21: #{tpu_custom_call.1} parent=5 // pred_check
        %p173 = pneg %p172
      $region22: #{tpu_custom_call.1} parent=5 // pred_check_branch
        %175 = sbr.rel (%p173) target = $region24
      $region23: #{tpu_custom_call.1} parent=5 // pred_region
        // Predicated region
        $region25: #{tpu_custom_call.1} parent=23 // pred_check
          %p176 = pneg %p50
        $region26: #{tpu_custom_call.1} parent=23 // pred_check_branch
          %178 = sbr.rel (%p176) target = $region28
        $region27: #{tpu_custom_call.1} parent=23 // pred_region
          %s179 = sand.u32 %s40, 1
          %s180 = scalar_lea.sflag [#allocation5], %s179
          %s181 = sand.u32 %s40, 1
          %s182 = smul.addr %s181, 8
          %s183 = scalar_lea.vmem [#allocation4], %s182
          %s185 = ssub.s32 128, 128
          %186 = vsyncadd %s180, %s185
          %s187 = smul.addr %s25, 128
          %s188 = scalar_lea.hbm %s1, %s187
          %s190 = sshll.u32 %s183, 4
          %s191 = int_to_ptr.vmem [resolvable:$true] %s190
          %193 = dma.hbm_to_vmem [thread:$0]  %s188, 128, %s191, %s180
        $region28: #{tpu_custom_call.1} parent=23 // pred_fallthru
          _
      $region24: #{tpu_custom_call.1} parent=5 // pred_fallthru
        _
      %p194 = scmp.le.s32.totalorder 1, %s18
      %p195 = scmp.lt.s32.totalorder %s18, 3
      %p196 = pnand %p194, %p195
      %p197 = pneg %p196
      // Predicated region
      $region29: #{tpu_custom_call.1} parent=5 // pred_check
        _
      $region30: #{tpu_custom_call.1} parent=5 // pred_check_branch
        %199 = sbr.rel (%p196) target = $region32
      $region31: #{tpu_custom_call.1} parent=5 // pred_region
        %s200 = ssub.s32 %s18, 1
        %s201 = sand.u32 %s43, 1
        %s202 = scalar_lea.sflag [#allocation5], %s201
        %s203 = sand.u32 %s43, 1
        %s204 = smul.addr %s203, 8
        %s205 = scalar_lea.vmem [#allocation4], %s204
        // Predicated region
        $region33: #{tpu_custom_call.1} parent=31 // pred_check
          %p206 = pneg %p56
        $region34: #{tpu_custom_call.1} parent=31 // pred_check_branch
          %208 = sbr.rel (%p206) target = $region36
        $region35: #{tpu_custom_call.1} parent=31 // pred_region
          %209 = dma.done %s202, 128
        $region36: #{tpu_custom_call.1} parent=31 // pred_fallthru
          _
        // Predicated region
        $region37: #{tpu_custom_call.1} parent=31 // pred_check
          %p210 = pneg %p82
        $region38: #{tpu_custom_call.1} parent=31 // pred_check_branch
          %212 = sbr.rel (%p210) target = $region40
        $region39: #{tpu_custom_call.1} parent=31 // pred_region
          %213 = dma.done [#allocation8], 1024
        $region40: #{tpu_custom_call.1} parent=31 // pred_fallthru
          _
        %s214 = sand.u32 %s43, 1
        %s215 = scalar_lea.sflag [#allocation5], %s214
        %s216 = sand.u32 %s43, 1
        %s217 = smul.addr %s216, 8
        %s218 = scalar_lea.vmem [#allocation4], %s217
        %p219 = pneg %p56
        %p220 = pneg %p53
        %p221 = pneg %p82
        %p222 = pneg %p79
        %p223 = scmp.lt.s32.totalorder %s28, 0
        %s224 = scalar_select %p223, %s28, 0
        %s225 = scalar_lea.vmem %s3, %s224
        %p226 = pneg %p108
        %p227 = pneg %p105
        %p228 = pneg %p136
        %p229 = pneg %p133
        %s230 = sand.u32 %s123, 1
        %s231 = scalar_lea.sflag [#allocation6], %s230
        %s232 = sand.u32 %s123, 1
        %s233 = smul.addr %s232, 8
        %s234 = scalar_lea.vmem [#allocation9], %s233
        %p235 = scmp.lt.s32.totalorder %s28, 0
        %s236 = scalar_select %p235, %s28, 0
        %s237 = scalar_lea.vmem %s3, %s236
        %s239 = smul.u32 %s28, 128
        %v240 = vld [vmem:[%s205] sm:$0xff]
        %v241 = vpack.c.bf16 %v240, %v240
        %v242 = vld [vmem:[#allocation7] sm:$0xf]
        %v243 = vld [vmem:[#allocation7 + $0x4] sm:$0xf]
        %v244 = vld [vmem:[#allocation7 + $0x8] sm:$0xf]
        %v245 = vld [vmem:[#allocation7 + $0xc] sm:$0xf]
        %v246 = vld [vmem:[#allocation7 + $0x10] sm:$0xf]
        %v247 = vld [vmem:[#allocation7 + $0x14] sm:$0xf]
        %v248 = vld [vmem:[#allocation7 + $0x18] sm:$0xf]
        %v249 = vld [vmem:[#allocation7 + $0x1c] sm:$0xf]
        %v250 = vld [vmem:[#allocation7 + $0x20] sm:$0xf]
        %v251 = vld [vmem:[#allocation7 + $0x24] sm:$0xf]
        %v252 = vld [vmem:[#allocation7 + $0x28] sm:$0xf]
        %v253 = vld [vmem:[#allocation7 + $0x2c] sm:$0xf]
        %v254 = vld [vmem:[#allocation7 + $0x30] sm:$0xf]
        %v255 = vld [vmem:[#allocation7 + $0x34] sm:$0xf]
        %v256 = vld [vmem:[#allocation7 + $0x38] sm:$0xf]
        %v257 = vld [vmem:[#allocation7 + $0x3c] sm:$0xf]
        %v258 = vld [vmem:[%s237] sm:$0x1]
        %v260 = vlaneseq
        %v261 = vshrl.u32 %v260, 7
        %v262 = vsub.s32 0, %v261
        %v263 = vrot.slane %v258, %v262
        %v281 = vunpack.c.l.b16 %v242
        %v282 = vunpack.c.l.b16 %v243
        %v283 = vunpack.c.l.b16 %v244
        %v284 = vunpack.c.l.b16 %v245
        %v285 = vunpack.c.l.b16 %v246
        %v286 = vunpack.c.l.b16 %v247
        %v287 = vunpack.c.l.b16 %v248
        %v288 = vunpack.c.l.b16 %v249
        %v289 = vunpack.c.l.b16 %v250
        %v290 = vunpack.c.l.b16 %v251
        %v291 = vunpack.c.l.b16 %v252
        %v292 = vunpack.c.l.b16 %v253
        %v293 = vunpack.c.l.b16 %v254
        %v294 = vunpack.c.l.b16 %v255
        %v295 = vunpack.c.l.b16 %v256
        %v296 = vunpack.c.l.b16 %v257
        %v297 = vpack.c.b16 %v282, %v281
        %v298 = vpack.c.b16 %v284, %v283
        %v299 = vpack.c.b16 %v286, %v285
        %v300 = vpack.c.b16 %v288, %v287
        %v301 = vpack.c.b16 %v290, %v289
        %v302 = vpack.c.b16 %v292, %v291
        %v303 = vpack.c.b16 %v294, %v293
        %v304 = vpack.c.b16 %v296, %v295
        %313 = vmatprep.subr.bf16.mxu0 0
        %314 = vmatpush1.bf16.msra.mxu0 %v297
        %315 = vmatprep.subr.bf16.mxu0 0
        %316 = vmatpush1.bf16.msra.mxu0 %v298
        %317 = vmatprep.subr.bf16.mxu0 0
        %318 = vmatpush1.bf16.msra.mxu0 %v299
        %319 = vmatprep.subr.bf16.mxu0 0
        %320 = vmatpush1.bf16.msra.mxu0 %v300
        %321 = vmatprep.subr.bf16.mxu0 0
        %322 = vmatpush1.bf16.msra.mxu0 %v301
        %323 = vmatprep.subr.bf16.mxu0 0
        %324 = vmatpush1.bf16.msra.mxu0 %v302
        %325 = vmatprep.subr.bf16.mxu0 0
        %326 = vmatpush1.bf16.msra.mxu0 %v303
        %327 = vmatprep.subr.bf16.mxu0 0
        %328 = vmatpush1.bf16.msra.mxu0 %v304
        %329 = vmatprep.subr.bf16.mxu0 0
        %330 = vmatpush1.bf16.msra.mxu0 0
        %331 = vmatprep.subr.bf16.mxu0 0
        %332 = vmatpush1.bf16.msra.mxu0 0
        %333 = vmatprep.subr.bf16.mxu0 0
        %334 = vmatpush1.bf16.msra.mxu0 0
        %335 = vmatprep.subr.bf16.mxu0 0
        %336 = vmatpush1.bf16.msra.mxu0 0
        %337 = vmatprep.subr.bf16.mxu0 0
        %338 = vmatpush1.bf16.msra.mxu0 0
        %339 = vmatprep.subr.bf16.mxu0 0
        %340 = vmatpush1.bf16.msra.mxu0 0
        %341 = vmatprep.subr.bf16.mxu0 0
        %342 = vmatpush1.bf16.msra.mxu0 0
        %343 = vmatprep.subr.bf16.mxu0 0
        %344 = vmatpush1.bf16.msra.mxu0 0
        %345 = vmatprep.mubr.bf16.mxu0 0
        %346 = vmatmul.mubr.bf16.gmra.mrb[0].mxu0 %v241
        %v347 = vpop.f32.mrb[0].mxu0
        %v348 = vadd.f32 %v263, %v347
        %v349 = vpop.f32.mrb[0].mxu0
        %v350 = vpop.f32.mrb[0].mxu0
        %v351 = vpop.f32.mrb[0].mxu0
        %352 = vdwg.mxu0
        %s353 = smul.u32 %s27, 1024
        %s354 = sadd.s32 %s353, %s239
        %v355 = vlaneseq
        %v356 = vshrl.u32 %v355, 7
        %v357 = vlaneseq
        %v358 = vand.u32 %v357, 127
        %v359 = vshll.u32 %v356, 7
        %v360 = vstv %s354
        %v361 = vadd.s32 %v360, %v359
        %v362 = vadd.s32 %v361, %v358
        %s363 = sld [smem:[#allocation3]]
        %s364 = smul.u32 %s363, 2654435769
        %v365 = vstv %s364
        %v366 = vxor.u32 %v362, %v365
        %v367 = vshrl.u32 %v366, 16
        %v368 = vxor.u32 %v366, %v367
        %v369 = vmul.u32 %v368, 2146121005
        %v370 = vshrl.u32 %v369, 15
        %v371 = vxor.u32 %v369, %v370
        %vm372 = vcmp.ge.u32.totalorder %v371, 429496729
        %v373 = vsel %vm372, 1, 0
        %v374 = vcvt.s32.f32 %v373
        %v375 = vmul.f32 %v374, 1.1111112
        %v376 = vmul.f32 %v348, %v375
        %v377 = vadd.f32 %v240, %v376
        %378 = vst [vmem:[%s234] sm:$0xff] %v377
        %s379 = sand.u32 %s123, 1
        %s380 = scalar_lea.sflag [#allocation6], %s379
        %s381 = sand.u32 %s123, 1
        %s382 = smul.addr %s381, 8
        %s383 = scalar_lea.vmem [#allocation9], %s382
        // Predicated region
        $region41: #{tpu_custom_call.1} parent=31 // pred_check
          %p384 = pneg %p133
        $region42: #{tpu_custom_call.1} parent=31 // pred_check_branch
          %386 = sbr.rel (%p384) target = $region44
        $region43: #{tpu_custom_call.1} parent=31 // pred_region
          %s388 = ssub.s32 128, 128
          %389 = vsyncadd %s380, %s388
          %s390 = sadd.s32 %s28, %s27
          %s391 = smul.addr %s390, 128
          %s392 = scalar_lea.hbm %s4, %s391
          %s394 = sshll.u32 %s383, 4
          %s395 = int_to_ptr.vmem [resolvable:$true] %s394
          %397 = dma.vmem_to_hbm [thread:$0]  %s395, 128, %s392, %s380
        $region44: #{tpu_custom_call.1} parent=31 // pred_fallthru
          _
      $region32: #{tpu_custom_call.1} parent=5 // pred_fallthru
        _
      %p398 = scmp.le.s32.totalorder 2, %s18
      // Predicated region
      $region45: #{tpu_custom_call.1} parent=5 // pred_check
        %p399 = pneg %p398
      $region46: #{tpu_custom_call.1} parent=5 // pred_check_branch
        %401 = sbr.rel (%p399) target = $region48
      $region47: #{tpu_custom_call.1} parent=5 // pred_region
        %s402 = ssub.s32 %s18, 2
        // Predicated region
        $region49: #{tpu_custom_call.1} parent=47 // pred_check
          %p403 = pneg %p139
        $region50: #{tpu_custom_call.1} parent=47 // pred_check_branch
          %405 = sbr.rel (%p403) target = $region52
        $region51: #{tpu_custom_call.1} parent=47 // pred_region
          %s406 = sand.u32 %s124, 1
          %s407 = scalar_lea.sflag [#allocation6], %s406
          %s408 = sand.u32 %s124, 1
          %s409 = smul.addr %s408, 8
          %s410 = scalar_lea.vmem [#allocation9], %s409
          %411 = dma.done %s407, 128
        $region52: #{tpu_custom_call.1} parent=47 // pred_fallthru
          _
      $region48: #{tpu_custom_call.1} parent=5 // pred_fallthru
        _
    $region6: #{tpu_custom_call.1} parent=1 // loop_footer
      %s22 = sadd.s32 1, %s18
    $region7: #{tpu_custom_call.1} parent=1 // loop_footer_branch
      %17 = sbr.rel target = $region3
    $region8: #{tpu_custom_call.1} parent=1 // loop_exit
      _
    %412 = vsyncpa [#allocation5], 1
    %s413 = scalar_lea.sflag [#allocation5], 1
    %414 = vsyncpa %s413, 1
    %415 = vsyncpa [#allocation8], 1
    %416 = vsyncpa [#allocation6], 1
    %s417 = scalar_lea.sflag [#allocation6], 1
    %418 = vsyncpa %s417, 1

</llo_original>
